<compile_context>
chip_gen: v7x
topology: tpu7x:2x2x1
jax: 0.10.0
libtpu: 0.0.40
codegen_flags: <defaults>
</compile_context>

<pallas_src>
import functools

import jax
import jax.numpy as jnp
from jax.experimental import pallas as pl
from jax.experimental.pallas import tpu as pltpu


_VMEM_LIMIT = 48 * 1024 * 1024  # scoped VMEM limit: > all defaults, < v7x physical


# ---------------------------------------------------------------------------
# helpers
# ---------------------------------------------------------------------------
def _tile(dim, target, granule):
    """Largest tile <= target that divides `dim` and is a multiple of `granule`."""
    if dim <= target:
        return dim
    t = (target // granule) * granule
    while t >= granule:
        if dim % t == 0:
            return t
        t -= granule
    return dim


def _bf16(x):
    return x.astype(jnp.bfloat16)


def _layernorm(x, g, b, eps=1e-5):
    x = x.astype(jnp.float32)
    mu = jnp.mean(x, axis=-1, keepdims=True)
    var = jnp.mean(jnp.square(x - mu), axis=-1, keepdims=True)
    return (x - mu) * jax.lax.rsqrt(var + eps) * g.astype(jnp.float32) + b.astype(jnp.float32)


def _mosaic(*sem):
    return pltpu.CompilerParams(dimension_semantics=sem,
                                vmem_limit_bytes=_VMEM_LIMIT)


# ---------------------------------------------------------------------------
# fused LN + QKV projection (self-attention); LN cached in VMEM across j tiles
# ---------------------------------------------------------------------------
def _ln_qkv_kernel(x_ref, g_ref, b_ref, wq_ref, bq_ref, wk_ref, wv_ref, bv_ref,
                   q_ref, k_ref, v_ref, xn_ref):
    @pl.when(pl.program_id(1) == 0)
    def _():
        xn_ref[...] = _layernorm(x_ref[...], g_ref[...], b_ref[...]).astype(xn_ref.dtype)

    xn = xn_ref[...]
    q_ref[...] = (jnp.dot(xn, wq_ref[...], preferred_element_type=jnp.float32)
                  + bq_ref[...]).astype(q_ref.dtype)
    k_ref[...] = jnp.dot(xn, wk_ref[...],                    # key: bias=False
                         preferred_element_type=jnp.float32).astype(k_ref.dtype)
    v_ref[...] = (jnp.dot(xn, wv_ref[...], preferred_element_type=jnp.float32)
                  + bv_ref[...]).astype(v_ref.dtype)


def ln_qkv(x, g, b, wq, bq, wk, wv, bv):
    M, D = x.shape
    N = wq.shape[1]
    tm = _tile(M, 256, 8)
    tn = _tile(N, 512, 128)
    spec_x = pl.BlockSpec((tm, D), lambda i, j: (i, 0))
    spec_d = pl.BlockSpec((1, D), lambda i, j: (0, 0))
    spec_w = pl.BlockSpec((D, tn), lambda i, j: (0, j))
    spec_b = pl.BlockSpec((1, tn), lambda i, j: (0, j))
    spec_o = pl.BlockSpec((tm, tn), lambda i, j: (i, j))
    out = jax.ShapeDtypeStruct((M, N), x.dtype)
    return pl.pallas_call(
        _ln_qkv_kernel,
        out_shape=(out, out, out),
        grid=(M // tm, N // tn),
        in_specs=[spec_x, spec_d, spec_d, spec_w, spec_b, spec_w, spec_w, spec_b],
        out_specs=(spec_o, spec_o, spec_o),
        scratch_shapes=[pltpu.VMEM((tm, D), jnp.bfloat16)],
        compiler_params=_mosaic("parallel", "arbitrary"),
    )(x, g, b, wq, bq, wk, wv, bv)


# ---------------------------------------------------------------------------
# fused LN + single linear (cross-attention query); LN cached across j tiles
# ---------------------------------------------------------------------------
def _ln_linear_kernel(x_ref, g_ref, b_ref, w_ref, bw_ref, o_ref, xn_ref):
    @pl.when(pl.program_id(1) == 0)
    def _():
        xn_ref[...] = _layernorm(x_ref[...], g_ref[...], b_ref[...]).astype(xn_ref.dtype)

    o_ref[...] = (jnp.dot(xn_ref[...], w_ref[...], preferred_element_type=jnp.float32)
                  + bw_ref[...]).astype(o_ref.dtype)


def ln_linear(x, g, b, w, bw):
    M, D = x.shape
    N = w.shape[1]
    tm = _tile(M, 256, 8)
    tn = _tile(N, 512, 128)
    return pl.pallas_call(
        _ln_linear_kernel,
        out_shape=jax.ShapeDtypeStruct((M, N), x.dtype),
        grid=(M // tm, N // tn),
        in_specs=[pl.BlockSpec((tm, D), lambda i, j: (i, 0)),
                  pl.BlockSpec((1, D), lambda i, j: (0, 0)),
                  pl.BlockSpec((1, D), lambda i, j: (0, 0)),
                  pl.BlockSpec((D, tn), lambda i, j: (0, j)),
                  pl.BlockSpec((1, tn), lambda i, j: (0, j))],
        out_specs=pl.BlockSpec((tm, tn), lambda i, j: (i, j)),
        scratch_shapes=[pltpu.VMEM((tm, D), jnp.bfloat16)],
        compiler_params=_mosaic("parallel", "arbitrary"),
    )(x, g, b, w, bw)


# ---------------------------------------------------------------------------
# fused K/V projection from encoder states (cross-attention)
# ---------------------------------------------------------------------------
def _kv_linear_kernel(x_ref, wk_ref, wv_ref, bv_ref, k_ref, v_ref):
    xb = x_ref[...]
    k_ref[...] = jnp.dot(xb, wk_ref[...],                    # key: bias=False
                         preferred_element_type=jnp.float32).astype(k_ref.dtype)
    v_ref[...] = (jnp.dot(xb, wv_ref[...], preferred_element_type=jnp.float32)
                  + bv_ref[...]).astype(v_ref.dtype)


def kv_linear(x, wk, wv, bv):
    M, D = x.shape
    N = wk.shape[1]
    tm = _tile(M, 256, 8)
    tn = _tile(N, 512, 128)
    spec_w = pl.BlockSpec((D, tn), lambda i, j: (0, j))
    spec_o = pl.BlockSpec((tm, tn), lambda i, j: (i, j))
    out = jax.ShapeDtypeStruct((M, N), x.dtype)
    return pl.pallas_call(
        _kv_linear_kernel,
        out_shape=(out, out),
        grid=(M // tm, N // tn),
        in_specs=[pl.BlockSpec((tm, D), lambda i, j: (i, 0)),
                  spec_w, spec_w,
                  pl.BlockSpec((1, tn), lambda i, j: (0, j))],
        out_specs=(spec_o, spec_o),
        compiler_params=_mosaic("parallel", "parallel"),
    )(x, wk, wv, bv)


# ---------------------------------------------------------------------------
# tiled linear with K-reduction accumulator + fused residual add (out proj)
# ---------------------------------------------------------------------------
def _linear_residual_kernel(x_ref, w_ref, b_ref, res_ref, o_ref, acc_ref):
    k = pl.program_id(2)

    @pl.when(k == 0)
    def _():
        acc_ref[...] = jnp.zeros_like(acc_ref)

    acc_ref[...] += jnp.dot(x_ref[...], w_ref[...],
                            preferred_element_type=jnp.float32)

    @pl.when(k == pl.num_programs(2) - 1)
    def _():
        o_ref[...] = (acc_ref[...] + b_ref[...]
                      + res_ref[...].astype(jnp.float32)).astype(o_ref.dtype)


def linear_residual(x, w, b, res):
    M, K = x.shape
    N = w.shape[1]
    tm = _tile(M, 256, 8)
    tn = _tile(N, 512, 128)
    tk = _tile(K, 512, 128)
    return pl.pallas_call(
        _linear_residual_kernel,
        out_shape=jax.ShapeDtypeStruct((M, N), x.dtype),
        grid=(M // tm, N // tn, K // tk),
        in_specs=[pl.BlockSpec((tm, tk), lambda i, j, k: (i, k)),
                  pl.BlockSpec((tk, tn), lambda i, j, k: (k, j)),
                  pl.BlockSpec((1, tn), lambda i, j, k: (0, j)),
                  pl.BlockSpec((tm, tn), lambda i, j, k: (i, j))],
        out_specs=pl.BlockSpec((tm, tn), lambda i, j, k: (i, j)),
        scratch_shapes=[pltpu.VMEM((tm, tn), jnp.float32)],
        compiler_params=_mosaic("parallel", "parallel", "arbitrary"),
    )(x, w, b, res)


# ---------------------------------------------------------------------------
# fused LN + MLP (linear -> erf GELU -> linear), hidden dim tiled, + residual
# ---------------------------------------------------------------------------
def _ln_mlp_kernel(x_ref, g_ref, b_ref, w1_ref, b1_ref, w2_ref, b2_ref, res_ref,
                   o_ref, xn_ref, acc_ref):
    j = pl.program_id(1)

    @pl.when(j == 0)
    def _():
        xn_ref[...] = _layernorm(x_ref[...], g_ref[...], b_ref[...]).astype(xn_ref.dtype)
        acc_ref[...] = jnp.zeros_like(acc_ref)

    h = jnp.dot(xn_ref[...], w1_ref[...],
                preferred_element_type=jnp.float32) + b1_ref[...]
    # exact-erf GELU (torch.nn.GELU default)
    h = 0.5 * h * (1.0 + jax.lax.erf(h * (2.0 ** -0.5)))
    acc_ref[...] += jnp.dot(h.astype(jnp.bfloat16), w2_ref[...],
                            preferred_element_type=jnp.float32)

    @pl.when(j == pl.num_programs(1) - 1)
    def _():
        o_ref[...] = (acc_ref[...] + b2_ref[...]
                      + res_ref[...].astype(jnp.float32)).astype(o_ref.dtype)


def ln_mlp(x, g, b, w1, b1, w2, b2, res):
    M, D = x.shape
    Dm = w1.shape[1]
    tm = _tile(M, 256, 8)
    th = _tile(Dm, 512, 128)
    return pl.pallas_call(
        _ln_mlp_kernel,
        out_shape=jax.ShapeDtypeStruct((M, D), x.dtype),
        grid=(M // tm, Dm // th),
        in_specs=[pl.BlockSpec((tm, D), lambda i, j: (i, 0)),
                  pl.BlockSpec((1, D), lambda i, j: (0, 0)),
                  pl.BlockSpec((1, D), lambda i, j: (0, 0)),
                  pl.BlockSpec((D, th), lambda i, j: (0, j)),
                  pl.BlockSpec((1, th), lambda i, j: (0, j)),
                  pl.BlockSpec((th, D), lambda i, j: (j, 0)),
                  pl.BlockSpec((1, D), lambda i, j: (0, 0)),
                  pl.BlockSpec((tm, D), lambda i, j: (i, 0))],
        out_specs=pl.BlockSpec((tm, D), lambda i, j: (i, 0)),
        scratch_shapes=[pltpu.VMEM((tm, D), jnp.bfloat16),   # cached LN(x)
                        pltpu.VMEM((tm, D), jnp.float32)],   # output accumulator
        compiler_params=_mosaic("parallel", "arbitrary"),
    )(x, g, b, w1, b1, w2, b2, res)


# ---------------------------------------------------------------------------
# fused final LN + tied-embedding logits: LN(x) @ tok_emb^T (trans_b in-kernel,
# vocab padded to 128 multiple so the V axis always tiles); LN cached across j
# ---------------------------------------------------------------------------
def _ln_logits_kernel(x_ref, g_ref, b_ref, w_ref, o_ref, xn_ref):
    @pl.when(pl.program_id(1) == 0)
    def _():
        xn_ref[...] = _layernorm(x_ref[...], g_ref[...], b_ref[...]).astype(xn_ref.dtype)

    o_ref[...] = jax.lax.dot_general(
        xn_ref[...], w_ref[...], (((1,), (1,)), ((), ())),
        preferred_element_type=jnp.float32)


def ln_logits(x, g, b, emb):
    M, D = x.shape
    V = emb.shape[0]
    tm = _tile(M, 256, 8)
    tv = _tile(V, 512, 128)
    return pl.pallas_call(
        _ln_logits_kernel,
        out_shape=jax.ShapeDtypeStruct((M, V), jnp.float32),
        grid=(M // tm, V // tv),
        in_specs=[pl.BlockSpec((tm, D), lambda i, j: (i, 0)),
                  pl.BlockSpec((1, D), lambda i, j: (0, 0)),
                  pl.BlockSpec((1, D), lambda i, j: (0, 0)),
                  pl.BlockSpec((tv, D), lambda i, j: (j, 0))],
        out_specs=pl.BlockSpec((tm, tv), lambda i, j: (i, j)),
        scratch_shapes=[pltpu.VMEM((tm, D), jnp.bfloat16)],
        compiler_params=_mosaic("parallel", "arbitrary"),
    )(x, g, b, emb)


# ---------------------------------------------------------------------------
# attention: grid = (batch, head-group); head groups are whole heads packed
# into lane-dense (multiple-of-128 when possible) chunks of the D axis, so
# the output is a single full-width store per tile (no 64-lane masked stores)
# and both v7x TensorCores stay busy even at B=1.
# ---------------------------------------------------------------------------
def _attn_group_width(D, dh):
    if D % 128 == 0 and 128 % dh == 0:
        return 128
    if D % 256 == 0 and 256 % dh == 0:
        return 256
    return D


def _attention_kernel(q_ref, k_ref, v_ref, o_ref, *, heads, dh, causal, scale):
    T = q_ref.shape[0]
    S = k_ref.shape[0]

    if causal:
        row = jax.lax.broadcasted_iota(jnp.int32, (T, S), 0)
        col = jax.lax.broadcasted_iota(jnp.int32, (T, S), 1)
        neg_mask = col > row

    ctxs = []
    for h in range(heads):                       # small bounded loop (heads/group)
        sl = slice(h * dh, (h + 1) * dh)
        qh = q_ref[:, sl]                        # (T, dh)  bf16
        kh = k_ref[:, sl]                        # (S, dh)  bf16
        vh = v_ref[:, sl]                        # (S, dh)  bf16
        logits = jax.lax.dot_general(qh, kh, (((1,), (1,)), ((), ())),
                                     preferred_element_type=jnp.float32) * scale
        if causal:
            logits = jnp.where(neg_mask, -jnp.inf, logits)
        mx = jnp.max(logits, axis=-1, keepdims=True)
        p = jnp.exp(logits - mx)
        p = p * pl.reciprocal(jnp.sum(p, axis=-1, keepdims=True), approx=True)
        ctxs.append(jnp.dot(p.astype(jnp.bfloat16), vh,
                            preferred_element_type=jnp.float32))   # (T, dh)

    full = ctxs[0] if len(ctxs) == 1 else jnp.concatenate(ctxs, axis=-1)
    o_ref[...] = full.astype(o_ref.dtype)        # single lane-dense store


def attention(q, k, v, n_head, causal):
    # TODO(synk): for very long encoder contexts, tile S flash-style (online
    # softmax with m/l/acc scratch); per-head-group blocks already keep the
    # resident K/V well inside VMEM for Whisper-scale shapes.
    B, T, D = q.shape
    S = k.shape[1]
    dh = D // n_head
    gw = _attn_group_width(D, dh)
    ng = D // gw
    kern = functools.partial(_attention_kernel, heads=gw // dh, dh=dh,
                             causal=causal, scale=float(dh) ** -0.5)
    return pl.pallas_call(
        kern,
        out_shape=jax.ShapeDtypeStruct((B, T, D), q.dtype),
        grid=(B, ng),
        in_specs=[pl.BlockSpec((None, T, gw), lambda b, g: (b, 0, g)),
                  pl.BlockSpec((None, S, gw), lambda b, g: (b, 0, g)),
                  pl.BlockSpec((None, S, gw), lambda b, g: (b, 0, g))],
        out_specs=pl.BlockSpec((None, T, gw), lambda b, g: (b, 0, g)),
        compiler_params=_mosaic("parallel", "parallel"),
    )(q, k, v)


# ---------------------------------------------------------------------------
# model forward (plain-JAX glue: embedding gather, positional add, reshapes)
# ---------------------------------------------------------------------------
def text_decoder_forward(params, tokens, xa, cache_idx, n_head):
    # cache_idx accepted for API parity; this stateless port always recomputes
    # the cross-attention K/V from xa (same result as a fresh cache miss).
    del cache_idx
    B, T = tokens.shape
    D = params["tok_emb"].shape[1]
    S = xa.shape[1]
    V = params["n_vocab"]

    # TODO(synk): token-embedding gather stays in plain JAX (data-dependent
    # gather; not worth a manual DMA-gather kernel).
    x = jnp.take(params["tok_emb"], tokens, axis=0).astype(jnp.float32) \
        + params["pos_emb"][:T]
    x = _bf16(x).reshape(B * T, D)          # bf16 activations end-to-end
    xa2 = _bf16(xa).reshape(B * S, D)

    for blk in params["blocks"]:
        # --- self attention: fused LN+QKV, in-kernel causal mask, fused residual
        a = blk["attn"]
        q, k, v = ln_qkv(x, blk["attn_ln_g"], blk["attn_ln_b"],
                         a["wq"], a["bq"], a["wk"], a["wv"], a["bv"])
        o = attention(q.reshape(B, T, D), k.reshape(B, T, D), v.reshape(B, T, D),
                      n_head, causal=True)
        x = linear_residual(o.reshape(B * T, D), a["wo"], a["bo"], x)

        # --- cross attention: fused LN+Q, fused K/V from xa, fused residual
        c = blk["cross"]
        q = ln_linear(x, blk["cross_ln_g"], blk["cross_ln_b"], c["wq"], c["bq"])
        k, v = kv_linear(xa2, c["wk"], c["wv"], c["bv"])
        o = attention(q.reshape(B, T, D), k.reshape(B, S, D), v.reshape(B, S, D),
                      n_head, causal=False)
        x = linear_residual(o.reshape(B * T, D), c["wo"], c["bo"], x)

        # --- MLP: fused LN + linear + GELU + linear (hidden tiled) + residual
        x = ln_mlp(x, blk["mlp_ln_g"], blk["mlp_ln_b"],
                   blk["w1"], blk["b1"], blk["w2"], blk["b2"], x)

    # final LN + tied-embedding logits (tok_emb.T never materialized)
    logits = ln_logits(x, params["ln_g"], params["ln_b"], params["tok_emb"])
    logits = logits.reshape(B, T, -1)
    if logits.shape[-1] != V:               # drop vocab padding columns
        logits = logits[..., :V]
    return logits


# ---------------------------------------------------------------------------
# parameter init (synthetic f32 "checkpoint") + one-time HBM-side prep:
# weights -> bf16, vocab padded to a multiple of 128 for clean tiling
# ---------------------------------------------------------------------------
def _dense(key, d_in, d_out, bias=True):
    kw, kb = jax.random.split(key)
    w = jax.random.normal(kw, (d_in, d_out), jnp.float32) * (d_in ** -0.5)
    if bias:
        b = jax.random.normal(kb, (1, d_out), jnp.float32) * 0.02
    else:
        b = jnp.zeros((1, d_out), jnp.float32)
    return w, b


def init_attn(key, n_state):
    ks = jax.random.split(key, 4)
    wq, bq = _dense(ks[0], n_state, n_state)
    wk, _ = _dense(ks[1], n_state, n_state, bias=False)    # key: bias=False
    wv, bv = _dense(ks[2], n_state, n_state)
    wo, bo = _dense(ks[3], n_state, n_state)
    return dict(wq=wq, bq=bq, wk=wk, wv=wv, bv=bv, wo=wo, bo=bo)


def init_block(key, n_state, n_mlp):
    ks = jax.random.split(key, 4)
    w1, b1 = _dense(ks[2], n_state, n_mlp)
    w2, b2 = _dense(ks[3], n_mlp, n_state)
    ones = jnp.ones((1, n_state), jnp.float32)
    zeros = jnp.zeros((1, n_state), jnp.float32)
    return dict(attn=init_attn(ks[0], n_state),
                attn_ln_g=ones, attn_ln_b=zeros,
                cross=init_attn(ks[1], n_state),
                cross_ln_g=ones, cross_ln_b=zeros,
                w1=w1, b1=b1, w2=w2, b2=b2,
                mlp_ln_g=ones, mlp_ln_b=zeros)


def init_decoder(key, n_vocab, n_layer, n_ctx, n_state):
    ks = jax.random.split(key, n_layer + 2)
    tok = jax.random.normal(ks[0], (n_vocab, n_state), jnp.float32) * 0.02
    pos = jax.random.normal(ks[1], (n_ctx, n_state), jnp.float32) * 0.02
    blocks = [init_block(ks[2 + i], n_state, 4 * n_state) for i in range(n_layer)]
    return dict(tok_emb=tok, pos_emb=pos, blocks=blocks,
                ln_g=jnp.ones((1, n_state), jnp.float32),
                ln_b=jnp.zeros((1, n_state), jnp.float32))


def prepare_params(params):
    """One-time conversion outside the kernels: weights -> bf16 in HBM,
    tied embedding padded so the vocab axis tiles in 128-lane chunks."""
    def cvt_attn(a):
        return dict(wq=_bf16(a["wq"]), bq=a["bq"], wk=_bf16(a["wk"]),
                    wv=_bf16(a["wv"]), bv=a["bv"], wo=_bf16(a["wo"]), bo=a["bo"])

    blocks = []
    for blk in params["blocks"]:
        blocks.append(dict(
            attn=cvt_attn(blk["attn"]),
            attn_ln_g=blk["attn_ln_g"], attn_ln_b=blk["attn_ln_b"],
            cross=cvt_attn(blk["cross"]),
            cross_ln_g=blk["cross_ln_g"], cross_ln_b=blk["cross_ln_b"],
            w1=_bf16(blk["w1"]), b1=blk["b1"],
            w2=_bf16(blk["w2"]), b2=blk["b2"],
            mlp_ln_g=blk["mlp_ln_g"], mlp_ln_b=blk["mlp_ln_b"]))

    V, _ = params["tok_emb"].shape
    v_pad = ((V + 127) // 128) * 128
    tok = _bf16(params["tok_emb"])
    if v_pad != V:
        tok = jnp.pad(tok, ((0, v_pad - V), (0, 0)))
    return dict(tok_emb=tok, n_vocab=V, pos_emb=params["pos_emb"], blocks=blocks,
                ln_g=params["ln_g"], ln_b=params["ln_b"])


# ---------------------------------------------------------------------------
if __name__ == "__main__":
    n_vocab, n_layer, n_ctx, n_state, n_head = 128, 2, 16, 32, 4
    B, T, S = 2, 8, 12  # batch, decoded tokens, encoder (audio) frames

    key = jax.random.PRNGKey(0)
    kp, kt, ka = jax.random.split(key, 3)
    params = prepare_params(init_decoder(kp, n_vocab, n_layer, n_ctx, n_state))
    tokens = jax.random.randint(kt, (B, T), 0, n_vocab, dtype=jnp.int32)
    xa = jax.random.normal(ka, (B, S, n_state), jnp.float32)

    logits = text_decoder_forward(params, tokens, xa, cache_idx=0, n_head=n_head)
    logits = jax.block_until_ready(logits)
    assert logits.shape == (B, T, n_vocab) and logits.dtype == jnp.float32
    assert bool(jnp.all(jnp.isfinite(logits)))
    print("KERNEL_OK")
</pallas_src>

<mosaic_0001>
module attributes {stable_mosaic.version = 11 : i64} {
  func.func @_ln_qkv_kernel(%arg0: i32, %arg1: i32, %arg2: memref<16x32xbf16, #tpu.memory_space<vmem>>, %arg3: memref<1x32xf32, #tpu.memory_space<vmem>>, %arg4: memref<1x32xf32, #tpu.memory_space<vmem>>, %arg5: memref<32x32xbf16, #tpu.memory_space<vmem>>, %arg6: memref<1x32xf32, #tpu.memory_space<vmem>>, %arg7: memref<32x32xbf16, #tpu.memory_space<vmem>>, %arg8: memref<32x32xbf16, #tpu.memory_space<vmem>>, %arg9: memref<1x32xf32, #tpu.memory_space<vmem>>, %arg10: memref<16x32xbf16, #tpu.memory_space<vmem>>, %arg11: memref<16x32xbf16, #tpu.memory_space<vmem>>, %arg12: memref<16x32xbf16, #tpu.memory_space<vmem>>, %arg13: memref<16x32xbf16, #tpu.memory_space<vmem>>) attributes {dimension_semantics = [#tpu.dimension_semantics<parallel>, #tpu.dimension_semantics<arbitrary>], iteration_bounds = array<i64: 1, 1>, scalar_prefetch = 0 : i64, scratch_operands = 1 : i64, tpu.core_type = #tpu.core_type<tc>, window_params = [{transform_indices = @transform_0, window_bounds = array<i64: 16, 32>}, {pipeline_mode = #tpu.pipeline_mode<synchronous>, transform_indices = @transform_1, window_bounds = array<i64: 1, 32>}, {pipeline_mode = #tpu.pipeline_mode<synchronous>, transform_indices = @transform_2, window_bounds = array<i64: 1, 32>}, {transform_indices = @transform_3, window_bounds = array<i64: 32, 32>}, {transform_indices = @transform_4, window_bounds = array<i64: 1, 32>}, {transform_indices = @transform_5, window_bounds = array<i64: 32, 32>}, {transform_indices = @transform_6, window_bounds = array<i64: 32, 32>}, {transform_indices = @transform_7, window_bounds = array<i64: 1, 32>}, {transform_indices = @transform_8, window_bounds = array<i64: 16, 32>}, {transform_indices = @transform_9, window_bounds = array<i64: 16, 32>}, {transform_indices = @transform_10, window_bounds = array<i64: 16, 32>}]} {
    %c0_i32 = arith.constant 0 : i32
    %0 = arith.cmpi eq, %arg1, %c0_i32 : i32
    %1 = arith.extui %0 : i1 to i32
    %c0_i32_0 = arith.constant 0 : i32
    %2 = arith.cmpi ne, %1, %c0_i32_0 : i32
    scf.if %2 {
      %c0_20 = arith.constant 0 : index
      %c0_21 = arith.constant 0 : index
      %22 = vector.load %arg2[%c0_20, %c0_21] : memref<16x32xbf16, #tpu.memory_space<vmem>>, vector<16x32xbf16>
      %c0_22 = arith.constant 0 : index
      %c0_23 = arith.constant 0 : index
      %23 = vector.load %arg3[%c0_22, %c0_23] : memref<1x32xf32, #tpu.memory_space<vmem>>, vector<1x32xf32>
      %c0_24 = arith.constant 0 : index
      %c0_25 = arith.constant 0 : index
      %24 = vector.load %arg4[%c0_24, %c0_25] : memref<1x32xf32, #tpu.memory_space<vmem>>, vector<1x32xf32>
      %25 = arith.extf %22 : vector<16x32xbf16> to vector<16x32xf32>
      %cst_26 = arith.constant dense<0.000000e+00> : vector<16xf32>
      %26 = vector.multi_reduction <add>, %25, %cst_26 [1] : vector<16x32xf32> to vector<16xf32>
      %27 = vector.shape_cast %26 : vector<16xf32> to vector<16x1xf32>
      %cst_27 = arith.constant 3.200000e+01 : f32
      %28 = vector.broadcast %cst_27 : f32 to vector<16x1xf32>
      %29 = arith.divf %27, %28 : vector<16x1xf32>
      %30 = vector.broadcast %29 : vector<16x1xf32> to vector<16x32xf32>
      %31 = arith.subf %25, %30 : vector<16x32xf32>
      %32 = arith.mulf %31, %31 : vector<16x32xf32>
      %cst_28 = arith.constant dense<0.000000e+00> : vector<16xf32>
      %33 = vector.multi_reduction <add>, %32, %cst_28 [1] : vector<16x32xf32> to vector<16xf32>
      %34 = vector.shape_cast %33 : vector<16xf32> to vector<16x1xf32>
      %cst_29 = arith.constant 3.200000e+01 : f32
      %35 = vector.broadcast %cst_29 : f32 to vector<16x1xf32>
      %36 = arith.divf %34, %35 : vector<16x1xf32>
      %37 = vector.broadcast %29 : vector<16x1xf32> to vector<16x32xf32>
      %38 = arith.subf %25, %37 : vector<16x32xf32>
      %cst_30 = arith.constant 9.99999974E-6 : f32
      %39 = vector.broadcast %cst_30 : f32 to vector<16x1xf32>
      %40 = arith.addf %36, %39 : vector<16x1xf32>
      %41 = math.rsqrt %40 : vector<16x1xf32>
      %42 = vector.broadcast %41 : vector<16x1xf32> to vector<16x32xf32>
      %43 = arith.mulf %38, %42 : vector<16x32xf32>
      %44 = vector.broadcast %23 : vector<1x32xf32> to vector<16x32xf32>
      %45 = arith.mulf %43, %44 : vector<16x32xf32>
      %46 = vector.broadcast %24 : vector<1x32xf32> to vector<16x32xf32>
      %47 = arith.addf %45, %46 : vector<16x32xf32>
      %48 = arith.truncf %47 : vector<16x32xf32> to vector<16x32xbf16>
      %c0_31 = arith.constant 0 : index
      %c0_32 = arith.constant 0 : index
      %49 = vector.load %arg13[%c0_31, %c0_32] : memref<16x32xbf16, #tpu.memory_space<vmem>>, vector<16x32xbf16>
      tpu.vector_store %arg13[%c0_31, %c0_32], %48 {strides = array<i32>} : memref<16x32xbf16, #tpu.memory_space<vmem>>, vector<16x32xbf16>,
    } else {
    }
    %c0 = arith.constant 0 : index
    %c0_1 = arith.constant 0 : index
    %3 = vector.load %arg13[%c0, %c0_1] : memref<16x32xbf16, #tpu.memory_space<vmem>>, vector<16x32xbf16>
    %c0_2 = arith.constant 0 : index
    %c0_3 = arith.constant 0 : index
    %4 = vector.load %arg5[%c0_2, %c0_3] : memref<32x32xbf16, #tpu.memory_space<vmem>>, vector<32x32xbf16>
    %cst = arith.constant dense<0.000000e+00> : vector<16x32xf32>
    %5 = tpu.matmul %3, %4, %cst {dimension_numbers = #tpu.dot_dimension_numbers<[1], [0], [0], [1], [0, 0, 1, 1], [], []>} : vector<16x32xbf16>, vector<32x32xbf16>, vector<16x32xf32> -> vector<16x32xf32>
    %c0_4 = arith.constant 0 : index
    %c0_5 = arith.constant 0 : index
    %6 = vector.load %arg6[%c0_4, %c0_5] : memref<1x32xf32, #tpu.memory_space<vmem>>, vector<1x32xf32>
    %7 = vector.broadcast %6 : vector<1x32xf32> to vector<16x32xf32>
    %8 = arith.addf %5, %7 : vector<16x32xf32>
    %9 = arith.truncf %8 : vector<16x32xf32> to vector<16x32xbf16>
    %c0_6 = arith.constant 0 : index
    %c0_7 = arith.constant 0 : index
    %10 = vector.load %arg10[%c0_6, %c0_7] : memref<16x32xbf16, #tpu.memory_space<vmem>>, vector<16x32xbf16>
    tpu.vector_store %arg10[%c0_6, %c0_7], %9 {strides = array<i32>} : memref<16x32xbf16, #tpu.memory_space<vmem>>, vector<16x32xbf16>,
    %c0_8 = arith.constant 0 : index
    %c0_9 = arith.constant 0 : index
    %11 = vector.load %arg7[%c0_8, %c0_9] : memref<32x32xbf16, #tpu.memory_space<vmem>>, vector<32x32xbf16>
    %cst_10 = arith.constant dense<0.000000e+00> : vector<16x32xf32>
    %12 = tpu.matmul %3, %11, %cst_10 {dimension_numbers = #tpu.dot_dimension_numbers<[1], [0], [0], [1], [0, 0, 1, 1], [], []>} : vector<16x32xbf16>, vector<32x32xbf16>, vector<16x32xf32> -> vector<16x32xf32>
    %13 = arith.truncf %12 : vector<16x32xf32> to vector<16x32xbf16>
    %c0_11 = arith.constant 0 : index
    %c0_12 = arith.constant 0 : index
    %14 = vector.load %arg11[%c0_11, %c0_12] : memref<16x32xbf16, #tpu.memory_space<vmem>>, vector<16x32xbf16>
    tpu.vector_store %arg11[%c0_11, %c0_12], %13 {strides = array<i32>} : memref<16x32xbf16, #tpu.memory_space<vmem>>, vector<16x32xbf16>,
    %c0_13 = arith.constant 0 : index
    %c0_14 = arith.constant 0 : index
    %15 = vector.load %arg8[%c0_13, %c0_14] : memref<32x32xbf16, #tpu.memory_space<vmem>>, vector<32x32xbf16>
    %cst_15 = arith.constant dense<0.000000e+00> : vector<16x32xf32>
    %16 = tpu.matmul %3, %15, %cst_15 {dimension_numbers = #tpu.dot_dimension_numbers<[1], [0], [0], [1], [0, 0, 1, 1], [], []>} : vector<16x32xbf16>, vector<32x32xbf16>, vector<16x32xf32> -> vector<16x32xf32>
    %c0_16 = arith.constant 0 : index
    %c0_17 = arith.constant 0 : index
    %17 = vector.load %arg9[%c0_16, %c0_17] : memref<1x32xf32, #tpu.memory_space<vmem>>, vector<1x32xf32>
    %18 = vector.broadcast %17 : vector<1x32xf32> to vector<16x32xf32>
    %19 = arith.addf %16, %18 : vector<16x32xf32>
    %20 = arith.truncf %19 : vector<16x32xf32> to vector<16x32xbf16>
    %c0_18 = arith.constant 0 : index
    %c0_19 = arith.constant 0 : index
    %21 = vector.load %arg12[%c0_18, %c0_19] : memref<16x32xbf16, #tpu.memory_space<vmem>>, vector<16x32xbf16>
    tpu.vector_store %arg12[%c0_18, %c0_19], %20 {strides = array<i32>} : memref<16x32xbf16, #tpu.memory_space<vmem>>, vector<16x32xbf16>,
    return
  }
  func.func @transform_0(%arg0: i32, %arg1: i32) -> (i32, i32) {
    %c0_i32 = arith.constant 0 : i32
    %c0_i32_0 = arith.constant 0 : i32
    return %arg0, %c0_i32 : i32, i32
  }
  func.func @transform_1(%arg0: i32, %arg1: i32) -> (i32, i32) {
    %c0_i32 = arith.constant 0 : i32
    %c0_i32_0 = arith.constant 0 : i32
    %c0_i32_1 = arith.constant 0 : i32
    return %c0_i32, %c0_i32_0 : i32, i32
  }
  func.func @transform_2(%arg0: i32, %arg1: i32) -> (i32, i32) {
    %c0_i32 = arith.constant 0 : i32
    %c0_i32_0 = arith.constant 0 : i32
    %c0_i32_1 = arith.constant 0 : i32
    return %c0_i32, %c0_i32_0 : i32, i32
  }
  func.func @transform_3(%arg0: i32, %arg1: i32) -> (i32, i32) {
    %c0_i32 = arith.constant 0 : i32
    %c0_i32_0 = arith.constant 0 : i32
    return %c0_i32, %arg1 : i32, i32
  }
  func.func @transform_4(%arg0: i32, %arg1: i32) -> (i32, i32) {
    %c0_i32 = arith.constant 0 : i32
    %c0_i32_0 = arith.constant 0 : i32
    return %c0_i32, %arg1 : i32, i32
  }
  func.func @transform_5(%arg0: i32, %arg1: i32) -> (i32, i32) {
    %c0_i32 = arith.constant 0 : i32
    %c0_i32_0 = arith.constant 0 : i32
    return %c0_i32, %arg1 : i32, i32
  }
  func.func @transform_6(%arg0: i32, %arg1: i32) -> (i32, i32) {
    %c0_i32 = arith.constant 0 : i32
    %c0_i32_0 = arith.constant 0 : i32
    return %c0_i32, %arg1 : i32, i32
  }
  func.func @transform_7(%arg0: i32, %arg1: i32) -> (i32, i32) {
    %c0_i32 = arith.constant 0 : i32
    %c0_i32_0 = arith.constant 0 : i32
    return %c0_i32, %arg1 : i32, i32
  }
  func.func @transform_8(%arg0: i32, %arg1: i32) -> (i32, i32) {
    %c0_i32 = arith.constant 0 : i32
    return %arg0, %arg1 : i32, i32
  }
  func.func @transform_9(%arg0: i32, %arg1: i32) -> (i32, i32) {
    %c0_i32 = arith.constant 0 : i32
    return %arg0, %arg1 : i32, i32
  }
  func.func @transform_10(%arg0: i32, %arg1: i32) -> (i32, i32) {
    %c0_i32 = arith.constant 0 : i32
    return %arg0, %arg1 : i32, i32
  }
}

</mosaic_0001>

<llo_original>
// kernel: tpu_custom_call.1
$region0: #{tpu_custom_call.1}
  #allocation0 [shape = 'u32[]', space=smem, size = 0x4, offset = 0x4, fixed_abs, tag = 'smem constant byte address 0x4 - core index']
  #allocation1 [shape = 'u32[144,128]{1,0:T(1,128)}', space=vmem, size = 0x12000, scoped, tag = 'internal scratch']
  #allocation2 [shape = 'bf16[16,32]{1,0:T(16,128)(2,1)}', space=vmem, size = 0x1000, scoped, tag = 'scratch operand']
  %s0 = inlined_call_operand.hbm [shape: bf16[16,32], index: 0, kind: input, shape index: {}]
  %s1 = inlined_call_operand.vmem [shape: f32[1,32], index: 1, kind: input, shape index: {}]
  %s2 = inlined_call_operand.vmem [shape: f32[1,32], index: 2, kind: input, shape index: {}]
  %s3 = inlined_call_operand.hbm [shape: bf16[32,32], index: 3, kind: input, shape index: {}]
  %s4 = inlined_call_operand.hbm [shape: f32[1,32], index: 4, kind: input, shape index: {}]
  %s5 = inlined_call_operand.vmem [shape: bf16[32,32], index: 5, kind: input, shape index: {}]
  %s6 = inlined_call_operand.hbm [shape: bf16[32,32], index: 6, kind: input, shape index: {}]
  %s7 = inlined_call_operand.vmem [shape: f32[1,32], index: 7, kind: input, shape index: {}]
  %s8 = inlined_call_operand.hbm [shape: bf16[16,32], index: 8, kind: output, shape index: {0}]
  %s9 = inlined_call_operand.hbm [shape: bf16[16,32], index: 9, kind: output, shape index: {1}]
  %s10 = inlined_call_operand.hbm [shape: bf16[16,32], index: 10, kind: output, shape index: {2}]
  %11 = xla_tuple %s8, %s9, %s10
  %s12 = sld [smem:[#allocation0]]
  $region78: #{tpu_custom_call.1} parent=0
    _
  %s14 = ssub.s32 1, %s12
  %s15 = scalar_select 0, %s14, %s12
  $region1: #{tpu_custom_call.1} parent=0
    #allocation3 [shape = 'u8[4096]{0}', space=vmem, size = 0x1000, scoped, tag = 'input window, operand 0, single buffered']
    #allocation4 [shape = 's32[1]{0}', space=sflag, size = 0x4, scoped, tag = 'scoped memory for tpu_custom_call.1']
    #allocation5 [shape = 's32[1]{0}', space=sflag, size = 0x4, scoped, tag = 'scoped memory for tpu_custom_call.1']
    #allocation6 [shape = 'u8[8192]{0}', space=vmem, size = 0x2000, scoped, tag = 'input window, operand 3, single buffered']
    #allocation7 [shape = 's32[1]{0}', space=sflag, size = 0x4, scoped, tag = 'scoped memory for tpu_custom_call.1']
    #allocation8 [shape = 'u8[512]{0}', space=vmem, size = 0x400, scoped, tag = 'input window, operand 4, single buffered']
    #allocation9 [shape = 'u8[8192]{0}', space=vmem, size = 0x2000, scoped, tag = 'input window, operand 6, single buffered']
    #allocation10 [shape = 's32[1]{0}', space=sflag, size = 0x4, scoped, tag = 'scoped memory for tpu_custom_call.1']
    #allocation11 [shape = 'u8[4096]{0}', space=vmem, size = 0x1000, scoped, tag = 'output window, operand 0, single buffered']
    #allocation12 [shape = 'u8[4096]{0}', space=vmem, size = 0x1000, scoped, tag = 'output window, operand 1, single buffered']
    #allocation13 [shape = 's32[1]{0}', space=sflag, size = 0x4, scoped, tag = 'scoped memory for tpu_custom_call.1']
    #allocation14 [shape = 'u8[4096]{0}', space=vmem, size = 0x1000, scoped, tag = 'output window, operand 2, single buffered']
    %16 = vsyncpa [#allocation4], 0
    %17 = vsyncpa [#allocation7], 0
    %18 = vsyncpa [#allocation10], 0
    %19 = vsyncpa [#allocation5], 0
    %20 = vsyncpa [#allocation13], 0
    // Predicated region
    $region2: #{tpu_custom_call.1} parent=1 // pred_check
      _
    $region3: #{tpu_custom_call.1} parent=1 // pred_check_branch
      %22 = sbr.rel (0) target = $region5
    $region4: #{tpu_custom_call.1} parent=1 // pred_region
      %s24 = ssub.s32 128, 128
      %25 = vsyncadd [#allocation4], %s24
      %s26 = sshll.u32 [#allocation3], 4
      %s27 = int_to_ptr.vmem [resolvable:$true] %s26
      %32 = dma.hbm_to_vmem [thread:$0]  %s0, 128, %s27, [#allocation4], 64, 64, 4
    $region5: #{tpu_custom_call.1} parent=1 // pred_fallthru
      _
    // Predicated region
    $region6: #{tpu_custom_call.1} parent=1 // pred_check
      _
    $region7: #{tpu_custom_call.1} parent=1 // pred_check_branch
      %34 = sbr.rel (0) target = $region9
    $region8: #{tpu_custom_call.1} parent=1 // pred_region
      _
    $region9: #{tpu_custom_call.1} parent=1 // pred_fallthru
      _
    // Predicated region
    $region10: #{tpu_custom_call.1} parent=1 // pred_check
      _
    $region11: #{tpu_custom_call.1} parent=1 // pred_check_branch
      %36 = sbr.rel (0) target = $region13
    $region12: #{tpu_custom_call.1} parent=1 // pred_region
      _
    $region13: #{tpu_custom_call.1} parent=1 // pred_fallthru
      _
    // Predicated region
    $region14: #{tpu_custom_call.1} parent=1 // pred_check
      _
    $region15: #{tpu_custom_call.1} parent=1 // pred_check_branch
      %38 = sbr.rel (0) target = $region17
    $region16: #{tpu_custom_call.1} parent=1 // pred_region
      %s40 = ssub.s32 256, 256
      %41 = vsyncadd [#allocation7], %s40
      %s42 = sshll.u32 [#allocation6], 4
      %s43 = int_to_ptr.vmem [resolvable:$true] %s42
      %48 = dma.hbm_to_vmem [thread:$0]  %s3, 256, %s43, [#allocation7], 64, 64, 4
    $region17: #{tpu_custom_call.1} parent=1 // pred_fallthru
      _
    // Predicated region
    $region18: #{tpu_custom_call.1} parent=1 // pred_check
      _
    $region19: #{tpu_custom_call.1} parent=1 // pred_check_branch
      %50 = sbr.rel (0) target = $region21
    $region20: #{tpu_custom_call.1} parent=1 // pred_region
      %s52 = ssub.s32 16, 16
      %53 = vsyncadd [#allocation7], %s52
      %s55 = sshll.u32 [#allocation8], 4
      %s56 = int_to_ptr.vmem [resolvable:$true] %s55
      %58 = dma.hbm_to_vmem [thread:$0]  %s4, 16, %s56, [#allocation7]
    $region21: #{tpu_custom_call.1} parent=1 // pred_fallthru
      _
    // Predicated region
    $region22: #{tpu_custom_call.1} parent=1 // pred_check
      _
    $region23: #{tpu_custom_call.1} parent=1 // pred_check_branch
      %60 = sbr.rel (0) target = $region25
    $region24: #{tpu_custom_call.1} parent=1 // pred_region
      _
    $region25: #{tpu_custom_call.1} parent=1 // pred_fallthru
      _
    // Predicated region
    $region26: #{tpu_custom_call.1} parent=1 // pred_check
      _
    $region27: #{tpu_custom_call.1} parent=1 // pred_check_branch
      %62 = sbr.rel (0) target = $region29
    $region28: #{tpu_custom_call.1} parent=1 // pred_region
      %s64 = ssub.s32 256, 256
      %65 = vsyncadd [#allocation10], %s64
      %s66 = sshll.u32 [#allocation9], 4
      %s67 = int_to_ptr.vmem [resolvable:$true] %s66
      %72 = dma.hbm_to_vmem [thread:$0]  %s6, 256, %s67, [#allocation10], 64, 64, 4
    $region29: #{tpu_custom_call.1} parent=1 // pred_fallthru
      _
    // Predicated region
    $region30: #{tpu_custom_call.1} parent=1 // pred_check
      _
    $region31: #{tpu_custom_call.1} parent=1 // pred_check_branch
      %74 = sbr.rel (0) target = $region33
    $region32: #{tpu_custom_call.1} parent=1 // pred_region
      _
    $region33: #{tpu_custom_call.1} parent=1 // pred_fallthru
      _
    // Predicated region
    $region34: #{tpu_custom_call.1} parent=1 // pred_check
      _
    $region35: #{tpu_custom_call.1} parent=1 // pred_check_branch
      %76 = sbr.rel (0) target = $region37
    $region36: #{tpu_custom_call.1} parent=1 // pred_region
      %77 = dma.done [#allocation4], 128
    $region37: #{tpu_custom_call.1} parent=1 // pred_fallthru
      _
    // Predicated region
    $region38: #{tpu_custom_call.1} parent=1 // pred_check
      _
    $region39: #{tpu_custom_call.1} parent=1 // pred_check_branch
      %79 = sbr.rel (0) target = $region41
    $region40: #{tpu_custom_call.1} parent=1 // pred_region
      %80 = dma.done [#allocation7], 256
    $region41: #{tpu_custom_call.1} parent=1 // pred_fallthru
      _
    // Predicated region
    $region42: #{tpu_custom_call.1} parent=1 // pred_check
      _
    $region43: #{tpu_custom_call.1} parent=1 // pred_check_branch
      %82 = sbr.rel (0) target = $region45
    $region44: #{tpu_custom_call.1} parent=1 // pred_region
      %83 = dma.done [#allocation7], 16
    $region45: #{tpu_custom_call.1} parent=1 // pred_fallthru
      _
    // Predicated region
    $region46: #{tpu_custom_call.1} parent=1 // pred_check
      _
    $region47: #{tpu_custom_call.1} parent=1 // pred_check_branch
      %85 = sbr.rel (0) target = $region49
    $region48: #{tpu_custom_call.1} parent=1 // pred_region
      %86 = dma.done [#allocation10], 256
    $region49: #{tpu_custom_call.1} parent=1 // pred_fallthru
      _
    %p88 = scmp.eq.s32.totalorder 0, 0
    // Predicated region
    $region50: #{tpu_custom_call.1} parent=1 // pred_check
      %p89 = pneg %p88
    $region51: #{tpu_custom_call.1} parent=1 // pred_check_branch
      %91 = sbr.rel (%p89) target = $region53
    $region52: #{tpu_custom_call.1} parent=1 // pred_region
      %v92 = vld [vmem:[#allocation3] sm:$0xf]
      %v93 = vld [vmem:[#allocation3 + $0x4] sm:$0xf]
      %v94 = vld [vmem:[%s1] sm:$0x1]
      %v95 = vld [vmem:[%s2] sm:$0x1]
      %v96 = vunpack.c.l.bf16 %v92
      %v97 = vunpack.c.l.bf16 %v93
      %vm98 = vcmask 261120
      %v99 = vsel %vm98, %v96, 0.0
      %100 = vadd.xlane.f32.xlu0 %v99
      %v101 = vpop.xlane.xlu0 %100
      %v102 = vsel %vm98, %v97, 0.0
      %103 = vadd.xlane.f32.xlu0 %v102
      %v104 = vpop.xlane.xlu0 %103
      %v105 = vrcp.pop 32.0
      %v106 = vmul.f32 %v101, %v105
      %v107 = vmul.f32 %v104, %v105
      %v108 = vsub.f32 %v96, %v106
      %v109 = vsub.f32 %v97, %v107
      %v110 = vmul.f32 %v108, %v108
      %v111 = vmul.f32 %v109, %v109
      %v112 = vsel %vm98, %v110, 0.0
      %113 = vadd.xlane.f32.xlu0 %v112
      %v114 = vpop.xlane.xlu0 %113
      %v115 = vsel %vm98, %v111, 0.0
      %116 = vadd.xlane.f32.xlu0 %v115
      %v117 = vpop.xlane.xlu0 %116
      %v118 = vmul.f32 %v114, %v105
      %v119 = vmul.f32 %v117, %v105
      %v120 = vadd.f32 %v118, 1e-05
      %v121 = vadd.f32 %v119, 1e-05
      %v122 = vrsqrt.pop %v120
      %v123 = vrsqrt.pop %v121
      %v124 = vmul.f32 %v108, %v122
      %v125 = vmul.f32 %v109, %v123
      %v127 = vlaneseq
      %v128 = vshrl.u32 %v127, 7
      %v129 = vsub.s32 0, %v128
      %v130 = vrot.slane %v94, %v129
      %v132 = vmul.f32 %v124, %v130
      %v133 = vmul.f32 %v125, %v130
      %v135 = vlaneseq
      %v136 = vshrl.u32 %v135, 7
      %v137 = vsub.s32 0, %v136
      %v138 = vrot.slane %v95, %v137
      %v140 = vadd.f32 %v132, %v138
      %v141 = vadd.f32 %v133, %v138
      %v142 = vpack.c.bf16 %v141, %v140
      %143 = vst.msk [vmem:[#allocation2] sm:$0xff] %vm98, %v142
    $region53: #{tpu_custom_call.1} parent=1 // pred_fallthru
      _
    %v144 = vld [vmem:[#allocation2] sm:$0xff]
    %v145 = vld [vmem:[#allocation6] sm:$0xf]
    %v146 = vld [vmem:[#allocation6 + $0x4] sm:$0xf]
    %v147 = vld [vmem:[#allocation6 + $0x8] sm:$0xf]
    %v148 = vld [vmem:[#allocation6 + $0xc] sm:$0xf]
    %v149 = vld [vmem:[#allocation8] sm:$0x1]
    %v151 = vlaneseq
    %v152 = vshrl.u32 %v151, 7
    %v153 = vsub.s32 0, %v152
    %v154 = vrot.slane %v149, %v153
    %v160 = vunpack.c.l.b16 %v145
    %v161 = vunpack.c.l.b16 %v146
    %v162 = vunpack.c.l.b16 %v147
    %v163 = vunpack.c.l.b16 %v148
    %v164 = vpack.c.b16 %v161, %v160
    %v165 = vpack.c.b16 %v163, %v162
    %vm168 = vcmask 261120
    %v170 = vsel %vm168, %v144, 0
    %172 = vmatprep.subr.bf16.mxu0 0
    %173 = vmatpush1.bf16.msra.mxu0 %v164
    %174 = vmatprep.subr.bf16.mxu0 0
    %175 = vmatpush1.bf16.msra.mxu0 %v165
    %176 = vmatprep.subr.bf16.mxu0 0
    %177 = vmatpush1.bf16.msra.mxu0 0
    %178 = vmatprep.subr.bf16.mxu0 0
    %179 = vmatpush1.bf16.msra.mxu0 0
    %180 = vmatprep.subr.bf16.mxu0 0
    %181 = vmatpush1.bf16.msra.mxu0 0
    %182 = vmatprep.subr.bf16.mxu0 0
    %183 = vmatpush1.bf16.msra.mxu0 0
    %184 = vmatprep.subr.bf16.mxu0 0
    %185 = vmatpush1.bf16.msra.mxu0 0
    %186 = vmatprep.subr.bf16.mxu0 0
    %187 = vmatpush1.bf16.msra.mxu0 0
    %188 = vmatprep.subr.bf16.mxu0 0
    %189 = vmatpush1.bf16.msra.mxu0 0
    %190 = vmatprep.subr.bf16.mxu0 0
    %191 = vmatpush1.bf16.msra.mxu0 0
    %192 = vmatprep.subr.bf16.mxu0 0
    %193 = vmatpush1.bf16.msra.mxu0 0
    %194 = vmatprep.subr.bf16.mxu0 0
    %195 = vmatpush1.bf16.msra.mxu0 0
    %196 = vmatprep.subr.bf16.mxu0 0
    %197 = vmatpush1.bf16.msra.mxu0 0
    %198 = vmatprep.subr.bf16.mxu0 0
    %199 = vmatpush1.bf16.msra.mxu0 0
    %200 = vmatprep.subr.bf16.mxu0 0
    %201 = vmatpush1.bf16.msra.mxu0 0
    %202 = vmatprep.subr.bf16.mxu0 0
    %203 = vmatpush1.bf16.msra.mxu0 0
    %204 = vmatprep.mubr.bf16.mxu0 0
    %205 = vmatmul.mubr.bf16.gmra.mrb[0].mxu0 %v170
    %v206 = vpop.f32.mrb[0].mxu0
    %v207 = vadd.f32 %v154, %v206
    %v208 = vpop.f32.mrb[0].mxu0
    %v209 = vpop.f32.mrb[0].mxu0
    %v210 = vadd.f32 %v154, %v209
    %v211 = vpop.f32.mrb[0].mxu0
    %212 = vdwg.mxu0
    %v213 = vpack.c.bf16 %v210, %v207
    %v215 = vunpack.c.l.b16 %v213
    %v216 = vunpack.c.h.b16 %v213
    %v217 = vpack.c.b16 %v215, %v215
    %v218 = vpack.c.b16 %v216, %v216
    %vm221 = vcmask 257024
    %222 = vst.msk [vmem:[#allocation11] sm:$0xf] %vm221, %v217
    %223 = vst.msk [vmem:[#allocation11 + $0x4] sm:$0xf] %vm221, %v218
    %v224 = vld [vmem:[%s5] sm:$0xf]
    %v225 = vld [vmem:[%s5 + $0x4] sm:$0xf]
    %v226 = vld [vmem:[%s5 + $0x8] sm:$0xf]
    %v227 = vld [vmem:[%s5 + $0xc] sm:$0xf]
    %v232 = vunpack.c.l.b16 %v224
    %v233 = vunpack.c.l.b16 %v225
    %v234 = vunpack.c.l.b16 %v226
    %v235 = vunpack.c.l.b16 %v227
    %v236 = vpack.c.b16 %v233, %v232
    %v237 = vpack.c.b16 %v235, %v234
    %240 = vmatprep.subr.bf16.mxu0 0
    %241 = vmatpush1.bf16.msra.mxu0 %v236
    %242 = vmatprep.subr.bf16.mxu0 0
    %243 = vmatpush1.bf16.msra.mxu0 %v237
    %244 = vmatprep.subr.bf16.mxu0 0
    %245 = vmatpush1.bf16.msra.mxu0 0
    %246 = vmatprep.subr.bf16.mxu0 0
    %247 = vmatpush1.bf16.msra.mxu0 0
    %248 = vmatprep.subr.bf16.mxu0 0
    %249 = vmatpush1.bf16.msra.mxu0 0
    %250 = vmatprep.subr.bf16.mxu0 0
    %251 = vmatpush1.bf16.msra.mxu0 0
    %252 = vmatprep.subr.bf16.mxu0 0
    %253 = vmatpush1.bf16.msra.mxu0 0
    %254 = vmatprep.subr.bf16.mxu0 0
    %255 = vmatpush1.bf16.msra.mxu0 0
    %256 = vmatprep.subr.bf16.mxu0 0
    %257 = vmatpush1.bf16.msra.mxu0 0
    %258 = vmatprep.subr.bf16.mxu0 0
    %259 = vmatpush1.bf16.msra.mxu0 0
    %260 = vmatprep.subr.bf16.mxu0 0
    %261 = vmatpush1.bf16.msra.mxu0 0
    %262 = vmatprep.subr.bf16.mxu0 0
    %263 = vmatpush1.bf16.msra.mxu0 0
    %264 = vmatprep.subr.bf16.mxu0 0
    %265 = vmatpush1.bf16.msra.mxu0 0
    %266 = vmatprep.subr.bf16.mxu0 0
    %267 = vmatpush1.bf16.msra.mxu0 0
    %268 = vmatprep.subr.bf16.mxu0 0
    %269 = vmatpush1.bf16.msra.mxu0 0
    %270 = vmatprep.subr.bf16.mxu0 0
    %271 = vmatpush1.bf16.msra.mxu0 0
    %272 = vmatprep.mubr.bf16.mxu0 0
    %273 = vmatmul.mubr.bf16.gmra.mrb[0].mxu0 %v170
    %v274 = vpop.f32.mrb[0].mxu0
    %v275 = vadd.f32 0.0, %v274
    %v276 = vpop.f32.mrb[0].mxu0
    %v277 = vpop.f32.mrb[0].mxu0
    %v278 = vadd.f32 0.0, %v277
    %v279 = vpop.f32.mrb[0].mxu0
    %280 = vdwg.mxu0
    %v281 = vpack.c.bf16 %v278, %v275
    %v283 = vunpack.c.l.b16 %v281
    %v284 = vunpack.c.h.b16 %v281
    %v285 = vpack.c.b16 %v283, %v283
    %v286 = vpack.c.b16 %v284, %v284
    %289 = vst.msk [vmem:[#allocation12] sm:$0xf] %vm221, %v285
    %290 = vst.msk [vmem:[#allocation12 + $0x4] sm:$0xf] %vm221, %v286
    %v291 = vld [vmem:[#allocation9] sm:$0xf]
    %v292 = vld [vmem:[#allocation9 + $0x4] sm:$0xf]
    %v293 = vld [vmem:[#allocation9 + $0x8] sm:$0xf]
    %v294 = vld [vmem:[#allocation9 + $0xc] sm:$0xf]
    %v295 = vld [vmem:[%s7] sm:$0x1]
    %v297 = vlaneseq
    %v298 = vshrl.u32 %v297, 7
    %v299 = vsub.s32 0, %v298
    %v300 = vrot.slane %v295, %v299
    %v306 = vunpack.c.l.b16 %v291
    %v307 = vunpack.c.l.b16 %v292
    %v308 = vunpack.c.l.b16 %v293
    %v309 = vunpack.c.l.b16 %v294
    %v310 = vpack.c.b16 %v307, %v306
    %v311 = vpack.c.b16 %v309, %v308
    %314 = vmatprep.subr.bf16.mxu0 0
    %315 = vmatpush1.bf16.msra.mxu0 %v310
    %316 = vmatprep.subr.bf16.mxu0 0
    %317 = vmatpush1.bf16.msra.mxu0 %v311
    %318 = vmatprep.subr.bf16.mxu0 0
    %319 = vmatpush1.bf16.msra.mxu0 0
    %320 = vmatprep.subr.bf16.mxu0 0
    %321 = vmatpush1.bf16.msra.mxu0 0
    %322 = vmatprep.subr.bf16.mxu0 0
    %323 = vmatpush1.bf16.msra.mxu0 0
    %324 = vmatprep.subr.bf16.mxu0 0
    %325 = vmatpush1.bf16.msra.mxu0 0
    %326 = vmatprep.subr.bf16.mxu0 0
    %327 = vmatpush1.bf16.msra.mxu0 0
    %328 = vmatprep.subr.bf16.mxu0 0
    %329 = vmatpush1.bf16.msra.mxu0 0
    %330 = vmatprep.subr.bf16.mxu0 0
    %331 = vmatpush1.bf16.msra.mxu0 0
    %332 = vmatprep.subr.bf16.mxu0 0
    %333 = vmatpush1.bf16.msra.mxu0 0
    %334 = vmatprep.subr.bf16.mxu0 0
    %335 = vmatpush1.bf16.msra.mxu0 0
    %336 = vmatprep.subr.bf16.mxu0 0
    %337 = vmatpush1.bf16.msra.mxu0 0
    %338 = vmatprep.subr.bf16.mxu0 0
    %339 = vmatpush1.bf16.msra.mxu0 0
    %340 = vmatprep.subr.bf16.mxu0 0
    %341 = vmatpush1.bf16.msra.mxu0 0
    %342 = vmatprep.subr.bf16.mxu0 0
    %343 = vmatpush1.bf16.msra.mxu0 0
    %344 = vmatprep.subr.bf16.mxu0 0
    %345 = vmatpush1.bf16.msra.mxu0 0
    %346 = vmatprep.mubr.bf16.mxu0 0
    %347 = vmatmul.mubr.bf16.gmra.mrb[0].mxu0 %v170
    %v348 = vpop.f32.mrb[0].mxu0
    %v349 = vadd.f32 %v300, %v348
    %v350 = vpop.f32.mrb[0].mxu0
    %v351 = vpop.f32.mrb[0].mxu0
    %v352 = vadd.f32 %v300, %v351
    %v353 = vpop.f32.mrb[0].mxu0
    %354 = vdwg.mxu0
    %v355 = vpack.c.bf16 %v352, %v349
    %v357 = vunpack.c.l.b16 %v355
    %v358 = vunpack.c.h.b16 %v355
    %v359 = vpack.c.b16 %v357, %v357
    %v360 = vpack.c.b16 %v358, %v358
    %363 = vst.msk [vmem:[#allocation14] sm:$0xf] %vm221, %v359
    %364 = vst.msk [vmem:[#allocation14 + $0x4] sm:$0xf] %vm221, %v360
    // Predicated region
    $region54: #{tpu_custom_call.1} parent=1 // pred_check
      _
    $region55: #{tpu_custom_call.1} parent=1 // pred_check_branch
      %366 = sbr.rel (0) target = $region57
    $region56: #{tpu_custom_call.1} parent=1 // pred_region
      %s368 = ssub.s32 128, 128
      %369 = vsyncadd [#allocation5], %s368
      %s370 = sshll.u32 [#allocation11], 4
      %s371 = int_to_ptr.vmem [resolvable:$true] %s370
      %376 = dma.vmem_to_hbm [thread:$0]  %s371, 128, %s8, [#allocation5], 64, 64, 4
    $region57: #{tpu_custom_call.1} parent=1 // pred_fallthru
      _
    // Predicated region
    $region58: #{tpu_custom_call.1} parent=1 // pred_check
      _
    $region59: #{tpu_custom_call.1} parent=1 // pred_check_branch
      %378 = sbr.rel (0) target = $region61
    $region60: #{tpu_custom_call.1} parent=1 // pred_region
      %s380 = ssub.s32 128, 128
      %381 = vsyncadd [#allocation13], %s380
      %s382 = sshll.u32 [#allocation12], 4
      %s383 = int_to_ptr.vmem [resolvable:$true] %s382
      %388 = dma.vmem_to_hbm [thread:$0]  %s383, 128, %s9, [#allocation13], 64, 64, 4
    $region61: #{tpu_custom_call.1} parent=1 // pred_fallthru
      _
    // Predicated region
    $region62: #{tpu_custom_call.1} parent=1 // pred_check
      _
    $region63: #{tpu_custom_call.1} parent=1 // pred_check_branch
      %390 = sbr.rel (0) target = $region65
    $region64: #{tpu_custom_call.1} parent=1 // pred_region
      %s392 = ssub.s32 128, 128
      %393 = vsyncadd [#allocation13], %s392
      %s394 = sshll.u32 [#allocation14], 4
      %s395 = int_to_ptr.vmem [resolvable:$true] %s394
      %400 = dma.vmem_to_hbm [thread:$0]  %s395, 128, %s10, [#allocation13], 64, 64, 4
    $region65: #{tpu_custom_call.1} parent=1 // pred_fallthru
      _
    // Predicated region
    $region66: #{tpu_custom_call.1} parent=1 // pred_check
      _
    $region67: #{tpu_custom_call.1} parent=1 // pred_check_branch
      %402 = sbr.rel (0) target = $region69
    $region68: #{tpu_custom_call.1} parent=1 // pred_region
      %403 = dma.done [#allocation5], 128
    $region69: #{tpu_custom_call.1} parent=1 // pred_fallthru
      _
    // Predicated region
    $region70: #{tpu_custom_call.1} parent=1 // pred_check
      _
    $region71: #{tpu_custom_call.1} parent=1 // pred_check_branch
      %405 = sbr.rel (0) target = $region73
    $region72: #{tpu_custom_call.1} parent=1 // pred_region
      %406 = dma.done [#allocation13], 128
    $region73: #{tpu_custom_call.1} parent=1 // pred_fallthru
      _
    // Predicated region
    $region74: #{tpu_custom_call.1} parent=1 // pred_check
      _
    $region75: #{tpu_custom_call.1} parent=1 // pred_check_branch
      %408 = sbr.rel (0) target = $region77
    $region76: #{tpu_custom_call.1} parent=1 // pred_region
      %409 = dma.done [#allocation13], 128
    $region77: #{tpu_custom_call.1} parent=1 // pred_fallthru
      _
    %410 = vsyncpa [#allocation4], 1
    %411 = vsyncpa [#allocation7], 1
    %412 = vsyncpa [#allocation10], 1
    %413 = vsyncpa [#allocation5], 1
    %414 = vsyncpa [#allocation13], 1

</llo_original>
